<compile_context>
chip_gen: v5e
topology: v5e:2x2
jax: 0.10.0
libtpu: 0.0.40
codegen_flags: <defaults>
</compile_context>

<pallas_src>
import functools

import jax
import jax.numpy as jnp
from jax import lax
from jax.experimental import pallas as pl
from jax.experimental.pallas import tpu as pltpu


def _similarity_kernel(hq_ref, ht_ref, o_ref, acc_ref, *,
                       inv_sqrt_hdim: float, precision):
    """One (tq, tt, tk) step of out = (h_q @ h_t.T) / sqrt(h_dim)."""
    k = pl.program_id(2)

    @pl.when(k == 0)
    def _init():
        acc_ref[...] = jnp.zeros_like(acc_ref)

    # NT matmul: contract the last (feature) dim of both tiles on the MXU.
    acc_ref[...] += lax.dot_general(
        hq_ref[...], ht_ref[...],
        dimension_numbers=(((1,), (1,)), ((), ())),
        preferred_element_type=jnp.float32,
        precision=precision,
    )

    @pl.when(k == pl.num_programs(2) - 1)
    def _store():
        # Scale the f32 accumulator (matches torch: mm / sqrt(h_dim)), then
        # cast once for the store.
        o_ref[...] = (acc_ref[...] * inv_sqrt_hdim).astype(o_ref.dtype)


def _physical_vmem_bytes() -> int:
    try:
        return int(pltpu.get_tpu_info().vmem_capacity_bytes)
    except Exception:
        return 64 * 1024 * 1024  # conservative fallback: v7x physical VMEM


def _round_up(x: int, m: int) -> int:
    return ((x + m - 1) // m) * m


def _pick_tk(d: int, max_tk: int = 512) -> int:
    """Feature-dim tile: full D when small, else a lane-aligned divisor."""
    if d <= max_tk:
        return d
    for tk in (512, 384, 256, 128):
        if d % tk == 0:
            return tk
    # No clean 128-multiple divisor: keep the full feature dim so K blocks
    # never read out-of-bounds garbage into the accumulation.
    return d


def similarity(h_t: jax.Array, h_q: jax.Array, h_dim: int,
               *, out_dtype=None) -> jax.Array:
    """Pallas TPU implementation of Similarity.forward(h_t, h_q)."""
    Nq, D = h_q.shape
    Nt, D2 = h_t.shape
    assert D == D2 == h_dim, (h_q.shape, h_t.shape, h_dim)

    # Default keeps reference semantics; pass jnp.bfloat16 when downstream
    # tolerates it — the kernel is output-write bound so it ~halves traffic.
    out_dtype = h_q.dtype if out_dtype is None else out_dtype
    in_bytes = jnp.dtype(h_q.dtype).itemsize
    out_bytes = jnp.dtype(out_dtype).itemsize

    tk = _pick_tk(D)

    # ---- generation-aware VMEM budget (128 MiB v5e/v6e, 64 MiB v7x) --------
    phys_vmem = _physical_vmem_bytes()
    budget = int(phys_vmem * 0.70)

    def working_set(a: int, b: int) -> int:
        # double-buffered inputs + double-buffered output + f32 accumulator
        return (2 * in_bytes * (a + b) * tk
                + 2 * out_bytes * a * b
                + 4 * a * b)

    # ---- tile selection: large lane-dense output blocks --------------------
    # Shrink tt first (floor 512), then tq (floor 256), then tt (floor 256).
    # The K split keeps inputs small, so the floors are essentially never hit.
    tq, tt = 512, 2048
    while working_set(tq, tt) > budget and tt > 512:
        tt //= 2
    while working_set(tq, tt) > budget and tq > 256:
        tq //= 2
    while working_set(tq, tt) > budget and tt > 256:
        tt //= 2

    # Clamp to actual extents (full-extent blocks are always legal).
    tq = min(tq, Nq)
    tt = min(tt, Nt)

    # Megacore (v7x has 2 TensorCores): if the whole problem collapsed to a
    # single spatial block but is big enough to matter, split one axis.
    if pl.cdiv(Nq, tq) == 1 and pl.cdiv(Nt, tt) == 1 and max(Nq, Nt) >= 512:
        if Nt >= Nq:
            tt = max(256, _round_up(pl.cdiv(Nt, 2), 128))
        else:
            tq = max(8, _round_up(pl.cdiv(Nq, 2), 8))

    m_blocks = pl.cdiv(Nq, tq)
    n_blocks = pl.cdiv(Nt, tt)
    k_blocks = pl.cdiv(D, tk)

    # ---- loop order: keep the cheaper-to-re-stream operand resident --------
    # h_q resident => h_t re-read m_blocks times; h_t resident => h_q re-read
    # n_blocks times.  Pick whichever minimizes HBM traffic.
    hq_resident = (m_blocks * Nt) <= (n_blocks * Nq)
    if hq_resident:
        grid = (m_blocks, n_blocks, k_blocks)
        hq_map = lambda i, j, k: (i, k)
        ht_map = lambda i, j, k: (j, k)
        out_map = lambda i, j, k: (i, j)
    else:
        grid = (n_blocks, m_blocks, k_blocks)
        hq_map = lambda j, i, k: (i, k)
        ht_map = lambda j, i, k: (j, k)
        out_map = lambda j, i, k: (i, j)

    vmem_limit = max(32 * 1024 * 1024, working_set(tq, tt) + 8 * 1024 * 1024)
    vmem_limit = int(min(vmem_limit, int(phys_vmem * 0.85)))

    kernel = functools.partial(
        _similarity_kernel,
        inv_sqrt_hdim=1.0 / (h_dim ** 0.5),
        # Match torch float32 mm numerics (f32 emulation on the MXU); for
        # bf16 inputs this is the native single pass anyway.
        precision=lax.Precision.HIGHEST,
    )

    return pl.pallas_call(
        kernel,
        out_shape=jax.ShapeDtypeStruct((Nq, Nt), out_dtype),
        grid_spec=pltpu.PrefetchScalarGridSpec(
            num_scalar_prefetch=0,
            grid=grid,
            in_specs=[
                pl.BlockSpec((tq, tk), hq_map),  # h_q tile (lane-dense in K)
                pl.BlockSpec((tt, tk), ht_map),  # h_t tile (no pre-transpose)
            ],
            out_specs=pl.BlockSpec((tq, tt), out_map),
            scratch_shapes=[pltpu.VMEM((tq, tt), jnp.float32)],
        ),
        compiler_params=pltpu.CompilerParams(
            dimension_semantics=("parallel", "parallel", "arbitrary"),
            vmem_limit_bytes=vmem_limit,
        ),
    )(h_q, h_t)


if __name__ == "__main__":
    key = jax.random.PRNGKey(0)
    k1, k2, k3, k4 = jax.random.split(key, 4)

    # Small-integer-valued float inputs: products and f32 accumulation are
    # exact regardless of MXU precision mode, so the reference check is
    # robust and deterministic.
    def _data(k, shape):
        return jax.random.randint(k, shape, -2, 3).astype(jnp.float32)

    # Case 1: shapes consistent with the module (h_dim=32, short sequences).
    h_dim = 32
    Nq, Nt = 8, 16
    h_q = _data(k1, (Nq, h_dim))
    h_t = _data(k2, (Nt, h_dim))
    out = jax.block_until_ready(similarity(h_t, h_q, h_dim))
    ref = (h_q @ h_t.T) / (h_dim ** 0.5)
    assert out.shape == (Nq, Nt)
    assert jnp.allclose(out, ref, atol=1e-5, rtol=1e-5), "case 1 mismatch"

    # Case 2: exercises the K (h_dim) accumulation path (640 = 5 * 128).
    h_dim2 = 640
    Nq2, Nt2 = 16, 24
    h_q2 = _data(k3, (Nq2, h_dim2))
    h_t2 = _data(k4, (Nt2, h_dim2))
    out2 = jax.block_until_ready(similarity(h_t2, h_q2, h_dim2))
    ref2 = (h_q2 @ h_t2.T) / (h_dim2 ** 0.5)
    assert out2.shape == (Nq2, Nt2)
    assert jnp.allclose(out2, ref2, atol=1e-5, rtol=1e-5), "case 2 mismatch"

    print("KERNEL_OK")
</pallas_src>

<mosaic_0001>
module attributes {stable_mosaic.version = 11 : i64} {
  func.func @_similarity_kernel(%arg0: i32, %arg1: i32, %arg2: i32, %arg3: memref<8x32xf32, #tpu.memory_space<vmem>>, %arg4: memref<16x32xf32, #tpu.memory_space<vmem>>, %arg5: memref<8x16xf32, #tpu.memory_space<vmem>>, %arg6: memref<8x16xf32, #tpu.memory_space<vmem>>) attributes {dimension_semantics = [#tpu.dimension_semantics<parallel>, #tpu.dimension_semantics<parallel>, #tpu.dimension_semantics<arbitrary>], iteration_bounds = array<i64: 1, 1, 1>, scalar_prefetch = 0 : i64, scratch_operands = 1 : i64, tpu.core_type = #tpu.core_type<tc>, window_params = [{transform_indices = @transform_0, window_bounds = array<i64: 8, 32>}, {transform_indices = @transform_1, window_bounds = array<i64: 16, 32>}, {transform_indices = @transform_2, window_bounds = array<i64: 8, 16>}]} {
    %c0_i32 = arith.constant 0 : i32
    %0 = arith.cmpi eq, %arg2, %c0_i32 : i32
    %1 = arith.extui %0 : i1 to i32
    %c0_i32_0 = arith.constant 0 : i32
    %2 = arith.cmpi ne, %1, %c0_i32_0 : i32
    scf.if %2 {
      %cst_10 = arith.constant 0.000000e+00 : f32
      %12 = vector.broadcast %cst_10 : f32 to vector<8x16xf32>
      %c0_11 = arith.constant 0 : index
      %c0_12 = arith.constant 0 : index
      %13 = vector.load %arg6[%c0_11, %c0_12] : memref<8x16xf32, #tpu.memory_space<vmem>>, vector<8x16xf32>
      tpu.vector_store %arg6[%c0_11, %c0_12], %12 {strides = array<i32>} : memref<8x16xf32, #tpu.memory_space<vmem>>, vector<8x16xf32>,
    } else {
    }
    %c0 = arith.constant 0 : index
    %c0_1 = arith.constant 0 : index
    %3 = vector.load %arg6[%c0, %c0_1] : memref<8x16xf32, #tpu.memory_space<vmem>>, vector<8x16xf32>
    %c0_2 = arith.constant 0 : index
    %c0_3 = arith.constant 0 : index
    %4 = vector.load %arg3[%c0_2, %c0_3] : memref<8x32xf32, #tpu.memory_space<vmem>>, vector<8x32xf32>
    %c0_4 = arith.constant 0 : index
    %c0_5 = arith.constant 0 : index
    %5 = vector.load %arg4[%c0_4, %c0_5] : memref<16x32xf32, #tpu.memory_space<vmem>>, vector<16x32xf32>
    %cst = arith.constant dense<0.000000e+00> : vector<8x16xf32>
    %6 = tpu.matmul %4, %5, %cst {dimension_numbers = #tpu.dot_dimension_numbers<[1], [1], [0], [0], [0, 0, 1, 0], [], []>, precision = #tpu.contract_precision<fp32>} : vector<8x32xf32>, vector<16x32xf32>, vector<8x16xf32> -> vector<8x16xf32>
    %7 = arith.addf %3, %6 : vector<8x16xf32>
    %c0_6 = arith.constant 0 : index
    %c0_7 = arith.constant 0 : index
    %8 = vector.load %arg6[%c0_6, %c0_7] : memref<8x16xf32, #tpu.memory_space<vmem>>, vector<8x16xf32>
    tpu.vector_store %arg6[%c0_6, %c0_7], %7 {strides = array<i32>} : memref<8x16xf32, #tpu.memory_space<vmem>>, vector<8x16xf32>,
    %c0_i32_8 = arith.constant 0 : i32
    %9 = arith.cmpi eq, %arg2, %c0_i32_8 : i32
    %10 = arith.extui %9 : i1 to i32
    %c0_i32_9 = arith.constant 0 : i32
    %11 = arith.cmpi ne, %10, %c0_i32_9 : i32
    scf.if %11 {
      %c0_10 = arith.constant 0 : index
      %c0_11 = arith.constant 0 : index
      %12 = vector.load %arg6[%c0_10, %c0_11] : memref<8x16xf32, #tpu.memory_space<vmem>>, vector<8x16xf32>
      %cst_12 = arith.constant 0.176776692 : f32
      %13 = vector.broadcast %cst_12 : f32 to vector<8x16xf32>
      %14 = arith.mulf %12, %13 : vector<8x16xf32>
      %c0_13 = arith.constant 0 : index
      %c0_14 = arith.constant 0 : index
      %15 = vector.load %arg5[%c0_13, %c0_14] : memref<8x16xf32, #tpu.memory_space<vmem>>, vector<8x16xf32>
      tpu.vector_store %arg5[%c0_13, %c0_14], %14 {strides = array<i32>} : memref<8x16xf32, #tpu.memory_space<vmem>>, vector<8x16xf32>,
    } else {
    }
    return
  }
  func.func @transform_0(%arg0: i32, %arg1: i32, %arg2: i32) -> (i32, i32) {
    %c0_i32 = arith.constant 0 : i32
    return %arg1, %arg2 : i32, i32
  }
  func.func @transform_1(%arg0: i32, %arg1: i32, %arg2: i32) -> (i32, i32) {
    %c0_i32 = arith.constant 0 : i32
    return %arg0, %arg2 : i32, i32
  }
  func.func @transform_2(%arg0: i32, %arg1: i32, %arg2: i32) -> (i32, i32) {
    %c0_i32 = arith.constant 0 : i32
    return %arg1, %arg0 : i32, i32
  }
}

</mosaic_0001>

<llo_original>
// kernel: tpu_custom_call.1
$region0: #{tpu_custom_call.1}
  #allocation0 [shape = 'u32[]', space=smem, size = 0x4, offset = 0x4, fixed_abs, tag = 'smem constant byte address 0x4 - core index']
  #allocation1 [shape = 'u32[72,128]{1,0:T(1,128)}', space=vmem, size = 0x9000, scoped, tag = 'internal scratch']
  #allocation2 [shape = 'f32[8,16]{1,0:T(8,128)}', space=vmem, size = 0x1000, scoped, tag = 'scratch operand']
  %s0 = inlined_call_operand.hbm [shape: f32[8,32], index: 0, kind: input, shape index: {}]
  %s1 = inlined_call_operand.hbm [shape: f32[16,32], index: 1, kind: input, shape index: {}]
  %s2 = inlined_call_operand.hbm [shape: f32[8,16], index: 2, kind: output, shape index: {}]
  %s3 = sld [smem:[#allocation0]]
  $region34: #{tpu_custom_call.1} parent=0
    _
  %s5 = ssub.s32 1, %s3
  %s6 = scalar_select 0, %s5, %s3
  $region1: #{tpu_custom_call.1} parent=0
    #allocation3 [shape = 'u8[4096]{0}', space=vmem, size = 0x1000, scoped, tag = 'input window, operand 0, single buffered']
    #allocation4 [shape = 's32[1]{0}', space=sflag, size = 0x4, scoped, tag = 'scoped memory for tpu_custom_call.1']
    #allocation5 [shape = 's32[1]{0}', space=sflag, size = 0x4, scoped, tag = 'scoped memory for tpu_custom_call.1']
    #allocation6 [shape = 'u8[8192]{0}', space=vmem, size = 0x2000, scoped, tag = 'input window, operand 1, single buffered']
    #allocation7 [shape = 's32[1]{0}', space=sflag, size = 0x4, scoped, tag = 'scoped memory for tpu_custom_call.1']
    #allocation8 [shape = 'u8[4096]{0}', space=vmem, size = 0x1000, scoped, tag = 'output window, operand 0, single buffered']
    %7 = vsyncpa [#allocation4], 0
    %8 = vsyncpa [#allocation7], 0
    %9 = vsyncpa [#allocation5], 0
    // Predicated region
    $region2: #{tpu_custom_call.1} parent=1 // pred_check
      _
    $region3: #{tpu_custom_call.1} parent=1 // pred_check_branch
      %11 = sbr.rel (0) target = $region5
    $region4: #{tpu_custom_call.1} parent=1 // pred_region
      %13 = vsyncadd [#allocation4], 0
      %s15 = sshll.u32 %s0, 4
      %s16 = int_to_ptr.hbm [resolvable:$true] %s15
      %s17 = sshll.u32 [#allocation3], 4
      %s18 = int_to_ptr.vmem [resolvable:$true] %s17
      %20 = dma.hbm_to_vmem [thread:$0]  %s16, 128, %s18, [#allocation4]
    $region5: #{tpu_custom_call.1} parent=1 // pred_fallthru
      _
    // Predicated region
    $region6: #{tpu_custom_call.1} parent=1 // pred_check
      _
    $region7: #{tpu_custom_call.1} parent=1 // pred_check_branch
      %22 = sbr.rel (0) target = $region9
    $region8: #{tpu_custom_call.1} parent=1 // pred_region
      %24 = vsyncadd [#allocation7], 0
      %s25 = sshll.u32 %s1, 4
      %s26 = int_to_ptr.hbm [resolvable:$true] %s25
      %s27 = sshll.u32 [#allocation6], 4
      %s28 = int_to_ptr.vmem [resolvable:$true] %s27
      %33 = dma.hbm_to_vmem [thread:$0]  %s26, 256, %s28, [#allocation7], 128, 128, 8
    $region9: #{tpu_custom_call.1} parent=1 // pred_fallthru
      _
    // Predicated region
    $region10: #{tpu_custom_call.1} parent=1 // pred_check
      _
    $region11: #{tpu_custom_call.1} parent=1 // pred_check_branch
      %35 = sbr.rel (0) target = $region13
    $region12: #{tpu_custom_call.1} parent=1 // pred_region
      %37 = dma.done [#allocation4], 128
    $region13: #{tpu_custom_call.1} parent=1 // pred_fallthru
      _
    // Predicated region
    $region14: #{tpu_custom_call.1} parent=1 // pred_check
      _
    $region15: #{tpu_custom_call.1} parent=1 // pred_check_branch
      %39 = sbr.rel (0) target = $region17
    $region16: #{tpu_custom_call.1} parent=1 // pred_region
      %41 = dma.done [#allocation7], 256
    $region17: #{tpu_custom_call.1} parent=1 // pred_fallthru
      _
    %p42 = scmp.eq.s32.totalorder 0, 0
    // Predicated region
    $region18: #{tpu_custom_call.1} parent=1 // pred_check
      %p43 = pneg %p42
    $region19: #{tpu_custom_call.1} parent=1 // pred_check_branch
      %45 = sbr.rel (%p43) target = $region21
    $region20: #{tpu_custom_call.1} parent=1 // pred_region
      %vm46 = vcmask 130048
      %47 = vst.msk [vmem:[#allocation2] sm:$0xff] %vm46, 0.0
    $region21: #{tpu_custom_call.1} parent=1 // pred_fallthru
      _
    %v48 = vld [vmem:[#allocation2] sm:$0xff]
    %v49 = vld [vmem:[#allocation3] sm:$0xff]
    %v50 = vld [vmem:[#allocation6] sm:$0xff]
    %v51 = vld [vmem:[#allocation6 + $0x8] sm:$0xff]
    %vm52 = vcmask 261120
    %v54 = vsel %vm52, %v49, 0
    %v57 = vsel %vm52, %v50, 0
    %v60 = vsel %vm52, %v51, 0
    %62 = vmatpush.xpose.msra.mxu0 0.0
    %63 = vmatpush.xpose.msra.mxu0 0.0
    %64 = vmatpush.xpose.msra.mxu0 0.0
    %65 = vmatpush.xpose.msra.mxu0 0.0
    %66 = vmatpush.xpose.msra.mxu0 0.0
    %67 = vmatpush.xpose.msra.mxu0 0.0
    %68 = vmatpush.xpose.msra.mxu0 0.0
    %69 = vmatpush.xpose.msra.mxu0 0.0
    %70 = vmatpush.xpose.msra.mxu0 0.0
    %71 = vmatpush.xpose.msra.mxu0 0.0
    %72 = vmatpush.xpose.msra.mxu0 0.0
    %73 = vmatpush.xpose.msra.mxu0 0.0
    %74 = vmatpush.xpose.msra.mxu0 0.0
    %75 = vmatpush.xpose.msra.mxu0 0.0
    %v76 = vand.u32 %v60, 4294901760
    %77 = vmatpush.xpose.msra.mxu0 %v76
    %v78 = vand.u32 %v57, 4294901760
    %79 = vmatpush.xpose.msra.mxu0 %v78
    %v80 = vand.u32 %v54, 4294901760
    %v81 = vsub.f32 %v54, %v80
    %v82 = vand.u32 %v81, 4294901760
    %v83 = vsub.f32 %v81, %v82
    %v84 = vand.u32 %v83, 4294901760
    %85 = vmatmul.f32.gmra.mxu0 %v84
    %v86 = vpop.f32.mrf.mxu0
    %v87 = vadd.f32 0.0, %v86
    %88 = vdwg.mxu0
    %89 = vmatpush.xpose.msra.mxu0 0.0
    %90 = vmatpush.xpose.msra.mxu0 0.0
    %91 = vmatpush.xpose.msra.mxu0 0.0
    %92 = vmatpush.xpose.msra.mxu0 0.0
    %93 = vmatpush.xpose.msra.mxu0 0.0
    %94 = vmatpush.xpose.msra.mxu0 0.0
    %95 = vmatpush.xpose.msra.mxu0 0.0
    %96 = vmatpush.xpose.msra.mxu0 0.0
    %97 = vmatpush.xpose.msra.mxu0 0.0
    %98 = vmatpush.xpose.msra.mxu0 0.0
    %99 = vmatpush.xpose.msra.mxu0 0.0
    %100 = vmatpush.xpose.msra.mxu0 0.0
    %101 = vmatpush.xpose.msra.mxu0 0.0
    %102 = vmatpush.xpose.msra.mxu0 0.0
    %v103 = vand.u32 %v60, 4294901760
    %v104 = vsub.f32 %v60, %v103
    %v105 = vand.u32 %v104, 4294901760
    %v106 = vsub.f32 %v104, %v105
    %v107 = vand.u32 %v106, 4294901760
    %108 = vmatpush.xpose.msra.mxu0 %v107
    %v109 = vand.u32 %v57, 4294901760
    %v110 = vsub.f32 %v57, %v109
    %v111 = vand.u32 %v110, 4294901760
    %v112 = vsub.f32 %v110, %v111
    %v113 = vand.u32 %v112, 4294901760
    %114 = vmatpush.xpose.msra.mxu0 %v113
    %v115 = vand.u32 %v54, 4294901760
    %116 = vmatmul.f32.gmra.mxu0 %v115
    %v117 = vpop.f32.mrf.mxu0
    %v118 = vadd.f32 %v87, %v117
    %119 = vdwg.mxu0
    %120 = vmatpush.xpose.msra.mxu0 0.0
    %121 = vmatpush.xpose.msra.mxu0 0.0
    %122 = vmatpush.xpose.msra.mxu0 0.0
    %123 = vmatpush.xpose.msra.mxu0 0.0
    %124 = vmatpush.xpose.msra.mxu0 0.0
    %125 = vmatpush.xpose.msra.mxu0 0.0
    %126 = vmatpush.xpose.msra.mxu0 0.0
    %127 = vmatpush.xpose.msra.mxu0 0.0
    %128 = vmatpush.xpose.msra.mxu0 0.0
    %129 = vmatpush.xpose.msra.mxu0 0.0
    %130 = vmatpush.xpose.msra.mxu0 0.0
    %131 = vmatpush.xpose.msra.mxu0 0.0
    %132 = vmatpush.xpose.msra.mxu0 0.0
    %133 = vmatpush.xpose.msra.mxu0 0.0
    %v134 = vand.u32 %v60, 4294901760
    %v135 = vsub.f32 %v60, %v134
    %136 = vmatpush.xpose.msra.mxu0 %v135
    %v137 = vand.u32 %v57, 4294901760
    %v138 = vsub.f32 %v57, %v137
    %139 = vmatpush.xpose.msra.mxu0 %v138
    %v140 = vand.u32 %v54, 4294901760
    %v141 = vsub.f32 %v54, %v140
    %142 = vmatmul.f32.gmra.mxu0 %v141
    %v143 = vpop.f32.mrf.mxu0
    %v144 = vadd.f32 %v118, %v143
    %145 = vdwg.mxu0
    %146 = vmatpush.xpose.msra.mxu0 0.0
    %147 = vmatpush.xpose.msra.mxu0 0.0
    %148 = vmatpush.xpose.msra.mxu0 0.0
    %149 = vmatpush.xpose.msra.mxu0 0.0
    %150 = vmatpush.xpose.msra.mxu0 0.0
    %151 = vmatpush.xpose.msra.mxu0 0.0
    %152 = vmatpush.xpose.msra.mxu0 0.0
    %153 = vmatpush.xpose.msra.mxu0 0.0
    %154 = vmatpush.xpose.msra.mxu0 0.0
    %155 = vmatpush.xpose.msra.mxu0 0.0
    %156 = vmatpush.xpose.msra.mxu0 0.0
    %157 = vmatpush.xpose.msra.mxu0 0.0
    %158 = vmatpush.xpose.msra.mxu0 0.0
    %159 = vmatpush.xpose.msra.mxu0 0.0
    %v160 = vand.u32 %v60, 4294901760
    %161 = vmatpush.xpose.msra.mxu0 %v160
    %v162 = vand.u32 %v57, 4294901760
    %163 = vmatpush.xpose.msra.mxu0 %v162
    %v164 = vand.u32 %v54, 4294901760
    %v165 = vsub.f32 %v54, %v164
    %v166 = vand.u32 %v165, 4294901760
    %167 = vmatmul.f32.gmra.mxu0 %v166
    %v168 = vpop.f32.mrf.mxu0
    %v169 = vadd.f32 %v144, %v168
    %170 = vdwg.mxu0
    %171 = vmatpush.xpose.msra.mxu0 0.0
    %172 = vmatpush.xpose.msra.mxu0 0.0
    %173 = vmatpush.xpose.msra.mxu0 0.0
    %174 = vmatpush.xpose.msra.mxu0 0.0
    %175 = vmatpush.xpose.msra.mxu0 0.0
    %176 = vmatpush.xpose.msra.mxu0 0.0
    %177 = vmatpush.xpose.msra.mxu0 0.0
    %178 = vmatpush.xpose.msra.mxu0 0.0
    %179 = vmatpush.xpose.msra.mxu0 0.0
    %180 = vmatpush.xpose.msra.mxu0 0.0
    %181 = vmatpush.xpose.msra.mxu0 0.0
    %182 = vmatpush.xpose.msra.mxu0 0.0
    %183 = vmatpush.xpose.msra.mxu0 0.0
    %184 = vmatpush.xpose.msra.mxu0 0.0
    %v185 = vand.u32 %v60, 4294901760
    %v186 = vsub.f32 %v60, %v185
    %v187 = vand.u32 %v186, 4294901760
    %188 = vmatpush.xpose.msra.mxu0 %v187
    %v189 = vand.u32 %v57, 4294901760
    %v190 = vsub.f32 %v57, %v189
    %v191 = vand.u32 %v190, 4294901760
    %192 = vmatpush.xpose.msra.mxu0 %v191
    %v193 = vand.u32 %v54, 4294901760
    %194 = vmatmul.f32.gmra.mxu0 %v193
    %v195 = vpop.f32.mrf.mxu0
    %v196 = vadd.f32 %v169, %v195
    %197 = vdwg.mxu0
    %198 = vmatpush.xpose.msra.mxu0 0.0
    %199 = vmatpush.xpose.msra.mxu0 0.0
    %200 = vmatpush.xpose.msra.mxu0 0.0
    %201 = vmatpush.xpose.msra.mxu0 0.0
    %202 = vmatpush.xpose.msra.mxu0 0.0
    %203 = vmatpush.xpose.msra.mxu0 0.0
    %204 = vmatpush.xpose.msra.mxu0 0.0
    %205 = vmatpush.xpose.msra.mxu0 0.0
    %206 = vmatpush.xpose.msra.mxu0 0.0
    %207 = vmatpush.xpose.msra.mxu0 0.0
    %208 = vmatpush.xpose.msra.mxu0 0.0
    %209 = vmatpush.xpose.msra.mxu0 0.0
    %210 = vmatpush.xpose.msra.mxu0 0.0
    %211 = vmatpush.xpose.msra.mxu0 0.0
    %v212 = vand.u32 %v60, 4294901760
    %213 = vmatpush.xpose.msra.mxu0 %v212
    %v214 = vand.u32 %v57, 4294901760
    %215 = vmatpush.xpose.msra.mxu0 %v214
    %v216 = vand.u32 %v54, 4294901760
    %217 = vmatmul.f32.gmra.mxu0 %v216
    %v218 = vpop.f32.mrf.mxu0
    %v219 = vadd.f32 %v196, %v218
    %220 = vdwg.mxu0
    %v221 = vadd.f32 %v48, %v219
    %vm222 = vcmask 130048
    %223 = vst.msk [vmem:[#allocation2] sm:$0xff] %vm222, %v221
    // Predicated region
    $region22: #{tpu_custom_call.1} parent=1 // pred_check
      %p224 = pneg %p42
    $region23: #{tpu_custom_call.1} parent=1 // pred_check_branch
      %226 = sbr.rel (%p224) target = $region25
    $region24: #{tpu_custom_call.1} parent=1 // pred_region
      %v227 = vld [vmem:[#allocation2] sm:$0xff]
      %v228 = vmul.f32 %v227, 0.17677669
      %229 = vst.msk [vmem:[#allocation8] sm:$0xff] %vm222, %v228
    $region25: #{tpu_custom_call.1} parent=1 // pred_fallthru
      _
    // Predicated region
    $region26: #{tpu_custom_call.1} parent=1 // pred_check
      _
    $region27: #{tpu_custom_call.1} parent=1 // pred_check_branch
      %231 = sbr.rel (0) target = $region29
    $region28: #{tpu_custom_call.1} parent=1 // pred_region
      %233 = vsyncadd [#allocation5], 0
      %s235 = sshll.u32 [#allocation8], 4
      %s236 = int_to_ptr.vmem [resolvable:$true] %s235
      %s237 = sshll.u32 %s2, 4
      %s238 = int_to_ptr.hbm [resolvable:$true] %s237
      %240 = dma.vmem_to_hbm [thread:$0]  %s236, 128, %s238, [#allocation5]
    $region29: #{tpu_custom_call.1} parent=1 // pred_fallthru
      _
    // Predicated region
    $region30: #{tpu_custom_call.1} parent=1 // pred_check
      _
    $region31: #{tpu_custom_call.1} parent=1 // pred_check_branch
      %242 = sbr.rel (0) target = $region33
    $region32: #{tpu_custom_call.1} parent=1 // pred_region
      %244 = dma.done [#allocation5], 128
    $region33: #{tpu_custom_call.1} parent=1 // pred_fallthru
      _
    %245 = vsyncpa [#allocation4], 1
    %246 = vsyncpa [#allocation7], 1
    %247 = vsyncpa [#allocation5], 1

</llo_original>
